<compile_context>
chip_gen: v6e
topology: v6e:2x2x1
jax: 0.10.0
libtpu: 0.0.40
codegen_flags: <defaults>
</compile_context>

<pallas_src>
import functools

import jax
import jax.numpy as jnp
from jax import lax
from jax.experimental import pallas as pl
from jax.experimental.pallas import tpu as pltpu


_DEFAULT_TILE_ROWS = 1024  # multiple of 8; ~12 MiB double-buffered at 600 f32 classes


def _round_up(x: int, m: int) -> int:
    return ((x + m - 1) // m) * m


def _pick_tile_rows(n: int, tile_rows: int) -> int:
    """Row-tile size: multiple of 8, <= tile_rows, and >= 2 grid steps when
    possible so both v7x TensorCores (and the DMA pipeline) stay busy."""
    if n < 16:
        return n                      # tiny: single tile, block == full extent
    t = min(tile_rows, _round_up(n, 8))
    if t >= n:                        # would collapse to a single grid step
        t = _round_up((n + 1) // 2, 8)
    return t


def _cxcywh_to_xyxy(b):
    cx, cy, w, h = b[..., 0:1], b[..., 1:2], b[..., 2:3], b[..., 3:4]
    return jnp.concatenate(
        [cx - 0.5 * w, cy - 0.5 * h, cx + 0.5 * w, cy + 0.5 * h], axis=-1)


def _sigmoid_f32(x):
    # sigmoid(x) = 0.5 * (tanh(x/2) + 1): a single EUP transcendental instead
    # of exp + reciprocal/divide on the VPU.
    return 0.5 * (jnp.tanh(0.5 * x) + 1.0)


def _scores_kernel(hoi_ref, obj_ref, hoi_out_ref, obj_out_ref, lbl_ref):
    # HOI interaction scores: elementwise sigmoid (f32 math, narrow on store).
    hoi = hoi_ref[...].astype(jnp.float32)                   # [T, Ch]
    hoi_out_ref[...] = _sigmoid_f32(hoi).astype(hoi_out_ref.dtype)

    # Object scores.
    obj = obj_ref[...].astype(jnp.float32)                   # [T, Co]
    obj_out_ref[...] = _sigmoid_f32(obj).astype(obj_out_ref.dtype)

    # Object labels: argmax(softmax(x)[..., :-1]) == argmax(x[..., :-1]).
    # Mask the last ("no object") class with -inf instead of slicing a lane
    # off; first-max argmax via max + where + min (plain reductions).
    co = obj.shape[-1]
    lane = lax.broadcasted_iota(jnp.int32, obj.shape, dimension=1)
    masked = jnp.where(lane < co - 1, obj, -jnp.inf)
    mval = jnp.max(masked, axis=-1, keepdims=True)            # [T, 1]
    cand = jnp.where(masked == mval, lane, co)                # first max wins
    lbl = jnp.min(cand, axis=-1).astype(jnp.int32)            # [T]
    # Lane-dense store: one (1, 1, T) row per grid step instead of a (T, 1)
    # column of 1/128-masked partial stores.
    lbl_ref[...] = lbl.reshape(1, 1, lbl.shape[0])


@functools.partial(
    jax.jit,
    static_argnames=("subject_category_id", "tile_rows", "scores_dtype"))
def postprocess_hoi_pallas(pred_hoi_logits, pred_obj_logits, pred_sub_boxes,
                           pred_obj_boxes, target_sizes, *,
                           subject_category_id: int,
                           tile_rows: int = _DEFAULT_TILE_ROWS,
                           scores_dtype=None):
    B, Q, Ch = pred_hoi_logits.shape
    Co = pred_obj_logits.shape[-1]
    N = B * Q

    # Optional bf16 writeback (semantic change, so gated behind a flag).
    hoi_dtype = scores_dtype if scores_dtype is not None else pred_hoi_logits.dtype
    obj_dtype = scores_dtype if scores_dtype is not None else pred_obj_logits.dtype

    # Contiguous (free) reshape: flatten batch*query into the row axis.
    hoi2d = pred_hoi_logits.reshape(N, Ch)
    obj2d = pred_obj_logits.reshape(N, Co)

    T = _pick_tile_rows(N, tile_rows)
    G = pl.cdiv(N, T)

    out_shapes = (
        jax.ShapeDtypeStruct((N, Ch), hoi_dtype),    # hoi_scores
        jax.ShapeDtypeStruct((N, Co), obj_dtype),    # obj_scores
        jax.ShapeDtypeStruct((G, 1, T), jnp.int32),  # obj_labels (lane-dense)
    )

    hoi_scores2d, obj_scores2d, lbl3d = pl.pallas_call(
        _scores_kernel,
        out_shape=out_shapes,
        grid=(G,),
        in_specs=[
            pl.BlockSpec((T, Ch), lambda i: (i, 0)),
            pl.BlockSpec((T, Co), lambda i: (i, 0)),
        ],
        out_specs=[
            pl.BlockSpec((T, Ch), lambda i: (i, 0)),
            pl.BlockSpec((T, Co), lambda i: (i, 0)),
            pl.BlockSpec((1, 1, T), lambda i: (i, 0, 0)),
        ],
        compiler_params=pltpu.CompilerParams(
            dimension_semantics=("parallel",)),
    )(hoi2d, obj2d)

    hoi_scores = hoi_scores2d.reshape(B, Q, Ch)
    obj_scores = obj_scores2d.reshape(B, Q, Co)
    # Flatten the (G, 1, T) lane-dense label rows back to per-row labels;
    # any padded tail rows (N not a multiple of T) are sliced off.
    obj_labels = lbl3d.reshape(-1)[:N].reshape(B, Q)

    # labels = cat(subject_category_id * ones, obj_labels) per image.
    labels = jnp.concatenate(
        [jnp.full((B, Q), subject_category_id, dtype=jnp.int32), obj_labels],
        axis=1)

    # Box path (tiny: B*Q*8 floats) — plain JAX; lane-hostile (last dim 4)
    # work isn't worth masked 4/128-lane stores in-kernel.
    ts = target_sizes.astype(jnp.float32)
    img_h, img_w = ts[:, 0], ts[:, 1]
    scale = jnp.stack([img_w, img_h, img_w, img_h], axis=1)[:, None, :]  # [B,1,4]
    sub_xyxy = _cxcywh_to_xyxy(pred_sub_boxes.astype(jnp.float32)) * scale
    obj_xyxy = _cxcywh_to_xyxy(pred_obj_boxes.astype(jnp.float32)) * scale
    boxes = jnp.concatenate([sub_xyxy, obj_xyxy], axis=1)                # [B,2Q,4]

    return hoi_scores, obj_scores, labels, boxes


class PostProcessHOITriplet:
    """JAX/Pallas re-implementation of the PyTorch PostProcessHOITriplet."""

    def __init__(self, subject_category_id: int = 0):
        self.subject_category_id = subject_category_id

    def __call__(self, outputs, target_sizes):
        assert outputs["pred_hoi_logits"].shape[0] == target_sizes.shape[0]
        assert target_sizes.shape[1] == 2
        hoi_scores, obj_scores, labels, boxes = postprocess_hoi_pallas(
            outputs["pred_hoi_logits"],
            outputs["pred_obj_logits"],
            outputs["pred_sub_boxes"],
            outputs["pred_obj_boxes"],
            target_sizes,
            subject_category_id=self.subject_category_id,
        )
        clip_visual = outputs["clip_visual"]
        clip_logits = outputs["clip_logits"]

        # TODO(synk): the original module moves results to CPU and returns a
        # python list of per-image dicts (and int64 labels); kept here as
        # host-side glue around the device-side compute.
        results = []
        B = hoi_scores.shape[0]
        n_boxes = boxes.shape[1]
        ids = jnp.arange(n_boxes, dtype=jnp.int32)
        for index in range(B):
            results.append({
                "labels": labels[index],
                "boxes": boxes[index],
                "hoi_scores": hoi_scores[index],
                "obj_scores": obj_scores[index],
                "clip_visual": clip_visual[index],
                "sub_ids": ids[: n_boxes // 2],
                "obj_ids": ids[n_boxes // 2:],
                "clip_logits": clip_logits[index],
            })
        return results


def _reference_jax(outputs, target_sizes, subject_category_id):
    """Pure-JAX reference mirroring the PyTorch forward, for verification."""
    hoi_scores = jax.nn.sigmoid(outputs["pred_hoi_logits"])
    obj_scores = jax.nn.sigmoid(outputs["pred_obj_logits"])
    obj_labels = jnp.argmax(
        jax.nn.softmax(outputs["pred_obj_logits"], -1)[..., :-1], axis=-1
    ).astype(jnp.int32)
    img_h, img_w = target_sizes[:, 0], target_sizes[:, 1]
    scale = jnp.stack([img_w, img_h, img_w, img_h], axis=1)[:, None, :]
    sub = _cxcywh_to_xyxy(outputs["pred_sub_boxes"]) * scale
    obj = _cxcywh_to_xyxy(outputs["pred_obj_boxes"]) * scale
    labels = jnp.concatenate(
        [jnp.full_like(obj_labels, subject_category_id), obj_labels], axis=1)
    boxes = jnp.concatenate([sub, obj], axis=1)
    return hoi_scores, obj_scores, labels, boxes


if __name__ == "__main__":
    key = jax.random.PRNGKey(0)
    B, Q = 2, 32         # batch, num queries  -> N = 64 rows, grid of 2 tiles
    NUM_HOI = 72         # HOI (verb/interaction) classes (non-128-multiple)
    NUM_OBJ = 21         # object classes incl. trailing "no object"
    CLIP_DIM = 32

    ks = jax.random.split(key, 6)
    outputs = {
        "pred_hoi_logits": jax.random.normal(ks[0], (B, Q, NUM_HOI), jnp.float32),
        "pred_obj_logits": jax.random.normal(ks[1], (B, Q, NUM_OBJ), jnp.float32),
        "pred_sub_boxes": jax.random.uniform(ks[2], (B, Q, 4), jnp.float32,
                                             minval=0.1, maxval=0.9),
        "pred_obj_boxes": jax.random.uniform(ks[3], (B, Q, 4), jnp.float32,
                                             minval=0.1, maxval=0.9),
        "clip_visual": jax.random.normal(ks[4], (B, CLIP_DIM), jnp.float32),
        "clip_logits": jax.random.normal(ks[5], (B, NUM_HOI), jnp.float32),
    }
    target_sizes = jnp.array([[480.0, 640.0], [512.0, 384.0]], jnp.float32)

    postproc = PostProcessHOITriplet(subject_category_id=0)
    results = postproc(outputs, target_sizes)
    jax.block_until_ready(results)

    # Sanity check against a pure-JAX reference of the PyTorch semantics.
    ref_hoi, ref_obj, ref_labels, ref_boxes = _reference_jax(
        outputs, target_sizes, subject_category_id=0)
    for i in range(B):
        assert jnp.allclose(results[i]["hoi_scores"], ref_hoi[i], atol=2e-5)
        assert jnp.allclose(results[i]["obj_scores"], ref_obj[i], atol=2e-5)
        assert jnp.array_equal(results[i]["labels"], ref_labels[i])
        assert jnp.allclose(results[i]["boxes"], ref_boxes[i], atol=1e-4)
        assert results[i]["sub_ids"].shape[0] == Q
        assert results[i]["obj_ids"].shape[0] == Q

    print("KERNEL_OK")
</pallas_src>

<mosaic_0001>
module attributes {stable_mosaic.version = 11 : i64} {
  func.func @_scores_kernel(%arg0: i32, %arg1: memref<32x72xf32, #tpu.memory_space<vmem>>, %arg2: memref<32x21xf32, #tpu.memory_space<vmem>>, %arg3: memref<32x72xf32, #tpu.memory_space<vmem>>, %arg4: memref<32x21xf32, #tpu.memory_space<vmem>>, %arg5: memref<1x1x32xi32, #tpu.memory_space<vmem>>) attributes {dimension_semantics = [#tpu.dimension_semantics<parallel>], iteration_bounds = array<i64: 2>, scalar_prefetch = 0 : i64, scratch_operands = 0 : i64, tpu.core_type = #tpu.core_type<tc>, window_params = [{transform_indices = @transform_0, window_bounds = array<i64: 32, 72>}, {transform_indices = @transform_1, window_bounds = array<i64: 32, 21>}, {transform_indices = @transform_2, window_bounds = array<i64: 32, 72>}, {transform_indices = @transform_3, window_bounds = array<i64: 32, 21>}, {transform_indices = @transform_4, window_bounds = array<i64: 1, 1, 32>}]} {
    %c0 = arith.constant 0 : index
    %c0_0 = arith.constant 0 : index
    %0 = vector.load %arg1[%c0, %c0_0] : memref<32x72xf32, #tpu.memory_space<vmem>>, vector<32x72xf32>
    %cst = arith.constant 5.000000e-01 : f32
    %1 = vector.broadcast %cst : f32 to vector<32x72xf32>
    %2 = arith.mulf %1, %0 : vector<32x72xf32>
    %3 = math.tanh %2 : vector<32x72xf32>
    %cst_1 = arith.constant 1.000000e+00 : f32
    %4 = vector.broadcast %cst_1 : f32 to vector<32x72xf32>
    %5 = arith.addf %3, %4 : vector<32x72xf32>
    %cst_2 = arith.constant 5.000000e-01 : f32
    %6 = vector.broadcast %cst_2 : f32 to vector<32x72xf32>
    %7 = arith.mulf %6, %5 : vector<32x72xf32>
    %c0_3 = arith.constant 0 : index
    %c0_4 = arith.constant 0 : index
    %8 = vector.load %arg3[%c0_3, %c0_4] : memref<32x72xf32, #tpu.memory_space<vmem>>, vector<32x72xf32>
    tpu.vector_store %arg3[%c0_3, %c0_4], %7 {strides = array<i32>} : memref<32x72xf32, #tpu.memory_space<vmem>>, vector<32x72xf32>,
    %c0_5 = arith.constant 0 : index
    %c0_6 = arith.constant 0 : index
    %9 = vector.load %arg2[%c0_5, %c0_6] : memref<32x21xf32, #tpu.memory_space<vmem>>, vector<32x21xf32>
    %cst_7 = arith.constant 5.000000e-01 : f32
    %10 = vector.broadcast %cst_7 : f32 to vector<32x21xf32>
    %11 = arith.mulf %10, %9 : vector<32x21xf32>
    %12 = math.tanh %11 : vector<32x21xf32>
    %cst_8 = arith.constant 1.000000e+00 : f32
    %13 = vector.broadcast %cst_8 : f32 to vector<32x21xf32>
    %14 = arith.addf %12, %13 : vector<32x21xf32>
    %cst_9 = arith.constant 5.000000e-01 : f32
    %15 = vector.broadcast %cst_9 : f32 to vector<32x21xf32>
    %16 = arith.mulf %15, %14 : vector<32x21xf32>
    %c0_10 = arith.constant 0 : index
    %c0_11 = arith.constant 0 : index
    %17 = vector.load %arg4[%c0_10, %c0_11] : memref<32x21xf32, #tpu.memory_space<vmem>>, vector<32x21xf32>
    tpu.vector_store %arg4[%c0_10, %c0_11], %16 {strides = array<i32>} : memref<32x21xf32, #tpu.memory_space<vmem>>, vector<32x21xf32>,
    %18 = tpu.iota {dimensions = array<i32: 1>} : vector<32x21xi32>
    %c20_i32 = arith.constant 20 : i32
    %19 = vector.broadcast %c20_i32 : i32 to vector<32x21xi32>
    %20 = arith.cmpi slt, %18, %19 : vector<32x21xi32>
    %cst_12 = arith.constant 0xFF800000 : f32
    %21 = vector.broadcast %cst_12 : f32 to vector<32x21xf32>
    %22 = arith.select %20, %9, %21 : vector<32x21xi1>, vector<32x21xf32>
    %cst_13 = arith.constant dense<0xFF800000> : vector<32xf32>
    %23 = vector.multi_reduction <maximumf>, %22, %cst_13 [1] : vector<32x21xf32> to vector<32xf32>
    %24 = vector.shape_cast %23 : vector<32xf32> to vector<32x1xf32>
    %25 = vector.broadcast %24 : vector<32x1xf32> to vector<32x21xf32>
    %26 = arith.cmpf oeq, %22, %25 : vector<32x21xf32>
    %c21_i32 = arith.constant 21 : i32
    %27 = vector.broadcast %c21_i32 : i32 to vector<32x21xi32>
    %28 = arith.select %26, %18, %27 : vector<32x21xi1>, vector<32x21xi32>
    %cst_14 = arith.constant dense<2147483647> : vector<32xi32>
    %29 = vector.multi_reduction <minsi>, %28, %cst_14 [1] : vector<32x21xi32> to vector<32xi32>
    %30 = vector.shape_cast %29 : vector<32xi32> to vector<1x1x32xi32>
    %c0_15 = arith.constant 0 : index
    %c0_16 = arith.constant 0 : index
    %c0_17 = arith.constant 0 : index
    %31 = vector.load %arg5[%c0_15, %c0_16, %c0_17] : memref<1x1x32xi32, #tpu.memory_space<vmem>>, vector<1x1x32xi32>
    tpu.vector_store %arg5[%c0_15, %c0_16, %c0_17], %30 {strides = array<i32>} : memref<1x1x32xi32, #tpu.memory_space<vmem>>, vector<1x1x32xi32>,
    return
  }
  func.func @transform_0(%arg0: i32) -> (i32, i32) {
    %c0_i32 = arith.constant 0 : i32
    %c0_i32_0 = arith.constant 0 : i32
    return %arg0, %c0_i32 : i32, i32
  }
  func.func @transform_1(%arg0: i32) -> (i32, i32) {
    %c0_i32 = arith.constant 0 : i32
    %c0_i32_0 = arith.constant 0 : i32
    return %arg0, %c0_i32 : i32, i32
  }
  func.func @transform_2(%arg0: i32) -> (i32, i32) {
    %c0_i32 = arith.constant 0 : i32
    %c0_i32_0 = arith.constant 0 : i32
    return %arg0, %c0_i32 : i32, i32
  }
  func.func @transform_3(%arg0: i32) -> (i32, i32) {
    %c0_i32 = arith.constant 0 : i32
    %c0_i32_0 = arith.constant 0 : i32
    return %arg0, %c0_i32 : i32, i32
  }
  func.func @transform_4(%arg0: i32) -> (i32, i32, i32) {
    %c0_i32 = arith.constant 0 : i32
    %c0_i32_0 = arith.constant 0 : i32
    %c0_i32_1 = arith.constant 0 : i32
    return %arg0, %c0_i32, %c0_i32_0 : i32, i32, i32
  }
}

</mosaic_0001>

<llo_original>
// kernel: postprocess_hoi_pallas.1
$region0: #{postprocess_hoi_pallas.1}
  #allocation0 [shape = 'u32[]', space=smem, size = 0x4, offset = 0x4, fixed_abs, tag = 'smem constant byte address 0x4 - core index']
  #allocation1 [shape = 'u32[144,128]{1,0:T(1,128)}', space=vmem, size = 0x12000, scoped, tag = 'internal scratch']
  %s0 = inlined_call_operand.vmem [shape: f32[64,72], index: 0, kind: input, shape index: {}]
  %s1 = inlined_call_operand.vmem [shape: f32[64,21], index: 1, kind: input, shape index: {}]
  %s2 = inlined_call_operand.hbm [shape: f32[64,72], index: 2, kind: output, shape index: {0}]
  %s3 = inlined_call_operand.vmem [shape: f32[64,21], index: 3, kind: output, shape index: {1}]
  %s4 = inlined_call_operand.vmem [shape: s32[2,1,32], index: 4, kind: output, shape index: {2}]
  %5 = xla_tuple %s2, %s3, %s4
  %s6 = sld [smem:[#allocation0]]
  $region57: #{postprocess_hoi_pallas.1} parent=0
    _
  %s8 = ssub.s32 1, %s6
  %s9 = scalar_select 0, %s8, %s6
  $region1: #{postprocess_hoi_pallas.1} parent=0
    #allocation2 [shape = 'u8[32768]{0}', space=vmem, size = 0x8000, scoped, tag = 'output window, operand 0']
    #allocation3 [shape = 's32[2]{0}', space=sflag, size = 0x8, scoped, tag = 'scoped memory for postprocess_hoi_pallas.1']
    %10 = vsyncpa [#allocation3], 0
    %s11 = scalar_lea.sflag [#allocation3], 1
    %12 = vsyncpa %s11, 0
    loop: start=0, step=1, limit=4
    $region2: #{postprocess_hoi_pallas.1} parent=1 // loop_pre_header
      _
    $region3: #{postprocess_hoi_pallas.1} parent=1 // loop_header
      %s14 = sphi 0, %s18
      %p15 = scmp.ge.s32.totalorder %s14, 4
      %s24 = sphi 0, %s26
      %s27 = sphi 0, %s24
      %s28 = sphi 0, %s27
      %s44 = sphi 0, %s28
      %s50 = sphi 0, %s52
      %s53 = sphi 0, %s50
      %s54 = sphi 0, %s53
      %s70 = sphi 0, %s54
      %s76 = sphi 0, %s78
      %s79 = sphi 0, %s76
      %s80 = sphi 0, %s79
      %s96 = sphi 0, %s80
      %s102 = sphi 0, %s104
      %s105 = sphi 0, %s102
      %s106 = sphi 0, %s105
      %s122 = sphi 0, %s106
      %s128 = sphi 0, %s130
      %s131 = sphi 0, %s128
      %s132 = sphi 0, %s131
      %s148 = sphi 0, %s132
    $region4: #{postprocess_hoi_pallas.1} parent=1 // loop_header_branch
      %17 = sbr.rel (%p15) target = $region8
    $region5: #{postprocess_hoi_pallas.1} parent=1 // loop_body
      %s19 = ssub.s32 %s14, 1
      %s20 = ssub.s32 %s14, 2
      %s21 = sadd.s32 %s14, 1
      %s22 = ssub.s32 %s14, %s21
      %p23 = scmp.eq.s32.totalorder %s22, 0
      %s25 = sadd.s32 %s24, 1
      %s26 = scalar_select %p23, %s24, %s25
      %p29 = pneg %p23
      %p30 = scmp.eq.s32.totalorder %s14, 1
      %p31 = por %p29, %p30
      %p32 = scmp.ne.s32.totalorder %s24, %s27
      %p33 = scmp.eq.s32.totalorder %s14, 0
      %p34 = por %p32, %p33
      %p35 = scmp.ne.s32.totalorder %s24, %s27
      %p36 = scmp.eq.s32.totalorder %s19, 1
      %p37 = por %p35, %p36
      %p38 = scmp.ne.s32.totalorder %s27, %s28
      %p39 = scmp.eq.s32.totalorder %s19, 0
      %p40 = por %p38, %p39
      %p41 = scmp.ne.s32.totalorder %s27, %s28
      %p42 = scmp.eq.s32.totalorder %s20, 1
      %p43 = por %p41, %p42
      %p45 = scmp.ne.s32.totalorder %s28, %s44
      %p46 = scmp.eq.s32.totalorder %s20, 0
      %p47 = por %p45, %p46
      %s48 = ssub.s32 %s14, %s21
      %p49 = scmp.eq.s32.totalorder %s48, 0
      %s51 = sadd.s32 %s50, 1
      %s52 = scalar_select %p49, %s50, %s51
      %p55 = pneg %p49
      %p56 = scmp.eq.s32.totalorder %s14, 1
      %p57 = por %p55, %p56
      %p58 = scmp.ne.s32.totalorder %s50, %s53
      %p59 = scmp.eq.s32.totalorder %s14, 0
      %p60 = por %p58, %p59
      %p61 = scmp.ne.s32.totalorder %s50, %s53
      %p62 = scmp.eq.s32.totalorder %s19, 1
      %p63 = por %p61, %p62
      %p64 = scmp.ne.s32.totalorder %s53, %s54
      %p65 = scmp.eq.s32.totalorder %s19, 0
      %p66 = por %p64, %p65
      %p67 = scmp.ne.s32.totalorder %s53, %s54
      %p68 = scmp.eq.s32.totalorder %s20, 1
      %p69 = por %p67, %p68
      %p71 = scmp.ne.s32.totalorder %s54, %s70
      %p72 = scmp.eq.s32.totalorder %s20, 0
      %p73 = por %p71, %p72
      %s74 = ssub.s32 %s14, %s21
      %p75 = scmp.eq.s32.totalorder %s74, 0
      %s77 = sadd.s32 %s76, 1
      %s78 = scalar_select %p75, %s76, %s77
      %p81 = pneg %p75
      %p82 = scmp.eq.s32.totalorder %s14, 1
      %p83 = por %p81, %p82
      %p84 = scmp.ne.s32.totalorder %s76, %s79
      %p85 = scmp.eq.s32.totalorder %s14, 0
      %p86 = por %p84, %p85
      %p87 = scmp.ne.s32.totalorder %s76, %s79
      %p88 = scmp.eq.s32.totalorder %s19, 1
      %p89 = por %p87, %p88
      %p90 = scmp.ne.s32.totalorder %s79, %s80
      %p91 = scmp.eq.s32.totalorder %s19, 0
      %p92 = por %p90, %p91
      %p93 = scmp.ne.s32.totalorder %s79, %s80
      %p94 = scmp.eq.s32.totalorder %s20, 1
      %p95 = por %p93, %p94
      %p97 = scmp.ne.s32.totalorder %s80, %s96
      %p98 = scmp.eq.s32.totalorder %s20, 0
      %p99 = por %p97, %p98
      %s100 = ssub.s32 %s14, %s21
      %p101 = scmp.eq.s32.totalorder %s100, 0
      %s103 = sadd.s32 %s102, 1
      %s104 = scalar_select %p101, %s102, %s103
      %p107 = pneg %p101
      %p108 = scmp.eq.s32.totalorder %s14, 1
      %p109 = por %p107, %p108
      %p110 = scmp.ne.s32.totalorder %s102, %s105
      %p111 = scmp.eq.s32.totalorder %s14, 0
      %p112 = por %p110, %p111
      %p113 = scmp.ne.s32.totalorder %s102, %s105
      %p114 = scmp.eq.s32.totalorder %s19, 1
      %p115 = por %p113, %p114
      %p116 = scmp.ne.s32.totalorder %s105, %s106
      %p117 = scmp.eq.s32.totalorder %s19, 0
      %p118 = por %p116, %p117
      %p119 = scmp.ne.s32.totalorder %s105, %s106
      %p120 = scmp.eq.s32.totalorder %s20, 1
      %p121 = por %p119, %p120
      %p123 = scmp.ne.s32.totalorder %s106, %s122
      %p124 = scmp.eq.s32.totalorder %s20, 0
      %p125 = por %p123, %p124
      %s126 = ssub.s32 %s14, %s21
      %p127 = scmp.eq.s32.totalorder %s126, 0
      %s129 = sadd.s32 %s128, 1
      %s130 = scalar_select %p127, %s128, %s129
      %p133 = pneg %p127
      %p134 = scmp.eq.s32.totalorder %s14, 1
      %p135 = por %p133, %p134
      %p136 = scmp.ne.s32.totalorder %s128, %s131
      %p137 = scmp.eq.s32.totalorder %s14, 0
      %p138 = por %p136, %p137
      %p139 = scmp.ne.s32.totalorder %s128, %s131
      %p140 = scmp.eq.s32.totalorder %s19, 1
      %p141 = por %p139, %p140
      %p142 = scmp.ne.s32.totalorder %s131, %s132
      %p143 = scmp.eq.s32.totalorder %s19, 0
      %p144 = por %p142, %p143
      %p145 = scmp.ne.s32.totalorder %s131, %s132
      %p146 = scmp.eq.s32.totalorder %s20, 1
      %p147 = por %p145, %p146
      %p149 = scmp.ne.s32.totalorder %s132, %s148
      %p150 = scmp.eq.s32.totalorder %s20, 0
      %p151 = por %p149, %p150
      %p152 = scmp.le.s32.totalorder 1, %s14
      %p153 = scmp.lt.s32.totalorder %s14, 3
      %p154 = pnand %p152, %p153
      %p155 = pneg %p154
      // Predicated region
      $region9: #{postprocess_hoi_pallas.1} parent=5 // pred_check
        _
      $region10: #{postprocess_hoi_pallas.1} parent=5 // pred_check_branch
        %157 = sbr.rel (%p154) target = $region12
      $region11: #{postprocess_hoi_pallas.1} parent=5 // pred_region
        %s158 = ssub.s32 %s14, 1
      $region12: #{postprocess_hoi_pallas.1} parent=5 // pred_fallthru
        _
      %p159 = scmp.lt.s32.totalorder %s14, 2
      // Predicated region
      $region13: #{postprocess_hoi_pallas.1} parent=5 // pred_check
        %p160 = pneg %p159
      $region14: #{postprocess_hoi_pallas.1} parent=5 // pred_check_branch
        %162 = sbr.rel (%p160) target = $region16
      $region15: #{postprocess_hoi_pallas.1} parent=5 // pred_region
        // Predicated region
        $region17: #{postprocess_hoi_pallas.1} parent=15 // pred_check
          %p163 = pneg %p34
        $region18: #{postprocess_hoi_pallas.1} parent=15 // pred_check_branch
          %165 = sbr.rel (%p163) target = $region20
        $region19: #{postprocess_hoi_pallas.1} parent=15 // pred_region
          %s166 = smul.u32 4, %s14
          %p167 = scmp.lt.s32.totalorder %s166, 7
          %s168 = scalar_select %p167, %s166, 7
          %s169 = smul.addr %s168, 8
          %s170 = scalar_lea.vmem %s0, %s169
          %s171 = smul.u32 4, %s14
        $region20: #{postprocess_hoi_pallas.1} parent=15 // pred_fallthru
          _
        // Predicated region
        $region21: #{postprocess_hoi_pallas.1} parent=15 // pred_check
          %p172 = pneg %p60
        $region22: #{postprocess_hoi_pallas.1} parent=15 // pred_check_branch
          %174 = sbr.rel (%p172) target = $region24
        $region23: #{postprocess_hoi_pallas.1} parent=15 // pred_region
          %s175 = smul.u32 4, %s14
          %p176 = scmp.lt.s32.totalorder %s175, 7
          %s177 = scalar_select %p176, %s175, 7
          %s178 = smul.addr %s177, 8
          %s179 = scalar_lea.vmem %s1, %s178
          %s180 = smul.u32 4, %s14
        $region24: #{postprocess_hoi_pallas.1} parent=15 // pred_fallthru
          _
      $region16: #{postprocess_hoi_pallas.1} parent=5 // pred_fallthru
        _
      %p181 = scmp.le.s32.totalorder 1, %s14
      %p182 = scmp.lt.s32.totalorder %s14, 3
      %p183 = pnand %p181, %p182
      %p184 = pneg %p183
      // Predicated region
      $region25: #{postprocess_hoi_pallas.1} parent=5 // pred_check
        _
      $region26: #{postprocess_hoi_pallas.1} parent=5 // pred_check_branch
        %186 = sbr.rel (%p183) target = $region28
      $region27: #{postprocess_hoi_pallas.1} parent=5 // pred_region
        %s187 = ssub.s32 %s14, 1
        %s188 = smul.u32 4, %s19
        %p189 = scmp.lt.s32.totalorder %s188, 7
        %s190 = scalar_select %p189, %s188, 7
        %s191 = smul.addr %s190, 8
        %s192 = scalar_lea.vmem %s0, %s191
        %p193 = pneg %p40
        %p194 = pneg %p37
        %s195 = smul.u32 4, %s19
        %p196 = scmp.lt.s32.totalorder %s195, 7
        %s197 = scalar_select %p196, %s195, 7
        %s198 = smul.addr %s197, 8
        %s199 = scalar_lea.vmem %s1, %s198
        %p200 = pneg %p66
        %p201 = pneg %p63
        %p202 = pneg %p92
        %p203 = pneg %p89
        %s204 = sand.u32 %s79, 1
        %s205 = scalar_lea.sflag [#allocation3], %s204
        %s206 = sand.u32 %s79, 1
        %s207 = smul.addr %s206, 32
        %s208 = scalar_lea.vmem [#allocation2], %s207
        %p209 = pneg %p118
        %p210 = pneg %p115
        %s211 = smul.u32 4, %s19
        %p212 = scmp.lt.s32.totalorder %s211, 7
        %s213 = scalar_select %p212, %s211, 7
        %s214 = smul.addr %s213, 8
        %s215 = scalar_lea.vmem %s3, %s214
        %p216 = pneg %p144
        %p217 = pneg %p141
        %p218 = scmp.lt.s32.totalorder %s19, 1
        %s219 = scalar_select %p218, %s19, 1
        %s220 = scalar_lea.vmem %s4, %s219
        %s221 = smul.u32 4, %s19
        %p222 = scmp.lt.s32.totalorder %s221, 7
        %s223 = scalar_select %p222, %s221, 7
        %s224 = smul.addr %s223, 8
        %s225 = scalar_lea.vmem %s0, %s224
        %s226 = smul.u32 4, %s19
        %s227 = smul.u32 4, %s19
        %p228 = scmp.lt.s32.totalorder %s227, 7
        %s229 = scalar_select %p228, %s227, 7
        %s230 = smul.addr %s229, 8
        %s231 = scalar_lea.vmem %s1, %s230
        %s232 = smul.u32 4, %s19
        %s233 = smul.u32 4, %s19
        %s234 = smul.u32 4, %s19
        %p235 = scmp.lt.s32.totalorder %s234, 7
        %s236 = scalar_select %p235, %s234, 7
        %s237 = smul.addr %s236, 8
        %s238 = scalar_lea.vmem %s3, %s237
        %s239 = smul.u32 4, %s19
        %p240 = scmp.lt.s32.totalorder %s19, 1
        %s241 = scalar_select %p240, %s19, 1
        %s242 = scalar_lea.vmem %s4, %s241
        %v243 = vld [vmem:[%s225] sm:$0xff]
        %v244 = vld [vmem:[%s225 + $0x8] sm:$0xff]
        %v245 = vld [vmem:[%s225 + $0x10] sm:$0xff]
        %v246 = vld [vmem:[%s225 + $0x18] sm:$0xff]
        %v247 = vmul.f32 %v243, 0.5
        %v248 = vmul.f32 %v244, 0.5
        %v249 = vmul.f32 %v245, 0.5
        %v250 = vmul.f32 %v246, 0.5
        %v251 = vtanh.pop %v247
        %v252 = vtanh.pop %v248
        %v253 = vtanh.pop %v249
        %v254 = vtanh.pop %v250
        %v255 = vadd.f32 %v251, 1.0
        %v256 = vadd.f32 %v252, 1.0
        %v257 = vadd.f32 %v253, 1.0
        %v258 = vadd.f32 %v254, 1.0
        %v259 = vmul.f32 %v255, 0.5
        %v260 = vmul.f32 %v256, 0.5
        %v261 = vmul.f32 %v257, 0.5
        %v262 = vmul.f32 %v258, 0.5
        %vm263 = vcmask 588800
        %264 = vst.msk [vmem:[%s208] sm:$0xff] %vm263, %v259
        %265 = vst.msk [vmem:[%s208 + $0x8] sm:$0xff] %vm263, %v260
        %266 = vst.msk [vmem:[%s208 + $0x10] sm:$0xff] %vm263, %v261
        %267 = vst.msk [vmem:[%s208 + $0x18] sm:$0xff] %vm263, %v262
        %v268 = vld [vmem:[%s231] sm:$0xff]
        %v269 = vld [vmem:[%s231 + $0x8] sm:$0xff]
        %v270 = vld [vmem:[%s231 + $0x10] sm:$0xff]
        %v271 = vld [vmem:[%s231 + $0x18] sm:$0xff]
        %v272 = vmul.f32 %v268, 0.5
        %v273 = vmul.f32 %v269, 0.5
        %v274 = vmul.f32 %v270, 0.5
        %v275 = vmul.f32 %v271, 0.5
        %v276 = vtanh.pop %v272
        %v277 = vtanh.pop %v273
        %v278 = vtanh.pop %v274
        %v279 = vtanh.pop %v275
        %v280 = vadd.f32 %v276, 1.0
        %v281 = vadd.f32 %v277, 1.0
        %v282 = vadd.f32 %v278, 1.0
        %v283 = vadd.f32 %v279, 1.0
        %v284 = vmul.f32 %v280, 0.5
        %v285 = vmul.f32 %v281, 0.5
        %v286 = vmul.f32 %v282, 0.5
        %v287 = vmul.f32 %v283, 0.5
        %vm288 = vcmask 171008
        %289 = vst.msk [vmem:[%s238] sm:$0xff] %vm288, %v284
        %290 = vst.msk [vmem:[%s238 + $0x8] sm:$0xff] %vm288, %v285
        %291 = vst.msk [vmem:[%s238 + $0x10] sm:$0xff] %vm288, %v286
        %292 = vst.msk [vmem:[%s238 + $0x18] sm:$0xff] %vm288, %v287
        %v293 = vlaneseq
        %v294 = vand.u32 %v293, 127
        %vm295 = vcmp.lt.s32.totalorder %v294, 20
        %v296 = vsel %vm295, %v268, -inf
        %v297 = vsel %vm295, %v269, -inf
        %v298 = vsel %vm295, %v270, -inf
        %v299 = vsel %vm295, %v271, -inf
        %v300 = vsel %vm288, %v296, -inf
        %301 = vmax.xlane.f32.xlu0 %v300
        %v302 = vpop.xlane.xlu0 %301
        %v303 = vsel %vm288, %v297, -inf
        %304 = vmax.xlane.f32.xlu0 %v303
        %v305 = vpop.xlane.xlu0 %304
        %v306 = vsel %vm288, %v298, -inf
        %307 = vmax.xlane.f32.xlu0 %v306
        %v308 = vpop.xlane.xlu0 %307
        %v309 = vsel %vm288, %v299, -inf
        %310 = vmax.xlane.f32.xlu0 %v309
        %v311 = vpop.xlane.xlu0 %310
        %vm312 = vcmp.eq.f32.partialorder %v296, %v302
        %vm313 = vcmp.eq.f32.partialorder %v297, %v305
        %vm314 = vcmp.eq.f32.partialorder %v298, %v308
        %vm315 = vcmp.eq.f32.partialorder %v299, %v311
        %v316 = vsel %vm312, %v294, 21
        %v317 = vsel %vm313, %v294, 21
        %v318 = vsel %vm314, %v294, 21
        %v319 = vsel %vm315, %v294, 21
        %v320 = vsel %vm288, %v316, 2147483647
        %v321 = vand.u32 %v320, 65535
        %v322 = vshra.s32 %v320, 16
        %v323 = vcvt.s32.f32 %v321
        %v324 = vcvt.s32.f32 %v322
        %325 = vmin.xlane.f32.xlu0 %v324
        %v326 = vpop.xlane.xlu0 %325
        %vm327 = vcmp.eq.f32.partialorder %v324, %v326
        %v328 = vsel %vm327, %v323, inf
        %329 = vmin.xlane.f32.xlu0 %v328
        %v330 = vpop.xlane.xlu0 %329
        %v331 = vcvt.f32.s32 %v330
        %v332 = vcvt.f32.s32 %v326
        %v333 = vshll.u32 %v332, 16
        %v334 = vadd.s32 %v333, %v331
        %v335 = vsel %vm288, %v317, 2147483647
        %v336 = vand.u32 %v335, 65535
        %v337 = vshra.s32 %v335, 16
        %v338 = vcvt.s32.f32 %v336
        %v339 = vcvt.s32.f32 %v337
        %340 = vmin.xlane.f32.xlu0 %v339
        %v341 = vpop.xlane.xlu0 %340
        %vm342 = vcmp.eq.f32.partialorder %v339, %v341
        %v343 = vsel %vm342, %v338, inf
        %344 = vmin.xlane.f32.xlu0 %v343
        %v345 = vpop.xlane.xlu0 %344
        %v346 = vcvt.f32.s32 %v345
        %v347 = vcvt.f32.s32 %v341
        %v348 = vshll.u32 %v347, 16
        %v349 = vadd.s32 %v348, %v346
        %v350 = vsel %vm288, %v318, 2147483647
        %v351 = vand.u32 %v350, 65535
        %v352 = vshra.s32 %v350, 16
        %v353 = vcvt.s32.f32 %v351
        %v354 = vcvt.s32.f32 %v352
        %355 = vmin.xlane.f32.xlu0 %v354
        %v356 = vpop.xlane.xlu0 %355
        %vm357 = vcmp.eq.f32.partialorder %v354, %v356
        %v358 = vsel %vm357, %v353, inf
        %359 = vmin.xlane.f32.xlu0 %v358
        %v360 = vpop.xlane.xlu0 %359
        %v361 = vcvt.f32.s32 %v360
        %v362 = vcvt.f32.s32 %v356
        %v363 = vshll.u32 %v362, 16
        %v364 = vadd.s32 %v363, %v361
        %v365 = vsel %vm288, %v319, 2147483647
        %v366 = vand.u32 %v365, 65535
        %v367 = vshra.s32 %v365, 16
        %v368 = vcvt.s32.f32 %v366
        %v369 = vcvt.s32.f32 %v367
        %370 = vmin.xlane.f32.xlu0 %v369
        %v371 = vpop.xlane.xlu0 %370
        %vm372 = vcmp.eq.f32.partialorder %v369, %v371
        %v373 = vsel %vm372, %v368, inf
        %374 = vmin.xlane.f32.xlu0 %v373
        %v375 = vpop.xlane.xlu0 %374
        %v376 = vcvt.f32.s32 %v375
        %v377 = vcvt.f32.s32 %v371
        %v378 = vshll.u32 %v377, 16
        %v379 = vadd.s32 %v378, %v376
        %v380 = vlaneseq
        %v381 = vshrl.u32 %v380, 7
        %v382 = vsub.s32 %v294, %v381
        %v383 = vrot.slane %v334, %v382
        %v384 = vadd.s32 %v294, 4294967288
        %v385 = vlaneseq
        %v386 = vshrl.u32 %v385, 7
        %v387 = vsub.s32 %v384, %v386
        %v388 = vrot.slane %v349, %v387
        %vm389 = vcmask 130112
        %v390 = vsel %vm389, %v388, %v383
        %v391 = vadd.s32 %v294, 4294967280
        %v392 = vlaneseq
        %v393 = vshrl.u32 %v392, 7
        %v394 = vsub.s32 %v391, %v393
        %v395 = vrot.slane %v364, %v394
        %vm396 = vcmask 195712
        %v397 = vsel %vm396, %v395, %v390
        %v398 = vadd.s32 %v294, 4294967272
        %v399 = vlaneseq
        %v400 = vshrl.u32 %v399, 7
        %v401 = vsub.s32 %v398, %v400
        %v402 = vrot.slane %v379, %v401
        %vm403 = vcmask 261312
        %v404 = vsel %vm403, %v402, %v397
        %vm405 = vcmask 253952
        %406 = vst.msk [vmem:[%s242] sm:$0x1] %vm405, %v404
        %s407 = sand.u32 %s79, 1
        %s408 = scalar_lea.sflag [#allocation3], %s407
        %s409 = sand.u32 %s79, 1
        %s410 = smul.addr %s409, 32
        %s411 = scalar_lea.vmem [#allocation2], %s410
        %s412 = smul.u32 4, %s19
        %p413 = scmp.lt.s32.totalorder %s412, 7
        %s414 = scalar_select %p413, %s412, 7
        %s415 = smul.addr %s414, 8
        %s416 = scalar_lea.vmem %s3, %s415
        %p417 = scmp.lt.s32.totalorder %s19, 1
        %s418 = scalar_select %p417, %s19, 1
        %s419 = scalar_lea.vmem %s4, %s418
        // Predicated region
        $region29: #{postprocess_hoi_pallas.1} parent=27 // pred_check
          %p420 = pneg %p89
        $region30: #{postprocess_hoi_pallas.1} parent=27 // pred_check_branch
          %422 = sbr.rel (%p420) target = $region32
        $region31: #{postprocess_hoi_pallas.1} parent=27 // pred_region
          %s423 = smul.u32 4, %s19
          %s425 = ssub.s32 512, 512
          %426 = vsyncadd %s408, %s425
          %s427 = smul.addr %s423, 128
          %s428 = scalar_lea.hbm %s2, %s427
          %s429 = sshll.u32 %s411, 4
          %s430 = int_to_ptr.vmem [resolvable:$true] %s429
          %435 = dma.vmem_to_hbm [thread:$0]  %s430, 512, %s428, %s408, 128, 128, 8
        $region32: #{postprocess_hoi_pallas.1} parent=27 // pred_fallthru
          _
        // Predicated region
        $region33: #{postprocess_hoi_pallas.1} parent=27 // pred_check
          %p436 = pneg %p115
        $region34: #{postprocess_hoi_pallas.1} parent=27 // pred_check_branch
          %438 = sbr.rel (%p436) target = $region36
        $region35: #{postprocess_hoi_pallas.1} parent=27 // pred_region
          %s439 = smul.u32 4, %s19
        $region36: #{postprocess_hoi_pallas.1} parent=27 // pred_fallthru
          _
        // Predicated region
        $region37: #{postprocess_hoi_pallas.1} parent=27 // pred_check
          %p440 = pneg %p141
        $region38: #{postprocess_hoi_pallas.1} parent=27 // pred_check_branch
          %442 = sbr.rel (%p440) target = $region40
        $region39: #{postprocess_hoi_pallas.1} parent=27 // pred_region
          _
        $region40: #{postprocess_hoi_pallas.1} parent=27 // pred_fallthru
          _
      $region28: #{postprocess_hoi_pallas.1} parent=5 // pred_fallthru
        _
      %p443 = scmp.le.s32.totalorder 2, %s14
      // Predicated region
      $region41: #{postprocess_hoi_pallas.1} parent=5 // pred_check
        %p444 = pneg %p443
      $region42: #{postprocess_hoi_pallas.1} parent=5 // pred_check_branch
        %446 = sbr.rel (%p444) target = $region44
      $region43: #{postprocess_hoi_pallas.1} parent=5 // pred_region
        %s447 = ssub.s32 %s14, 2
        // Predicated region
        $region45: #{postprocess_hoi_pallas.1} parent=43 // pred_check
          %p448 = pneg %p95
        $region46: #{postprocess_hoi_pallas.1} parent=43 // pred_check_branch
          %450 = sbr.rel (%p448) target = $region48
        $region47: #{postprocess_hoi_pallas.1} parent=43 // pred_region
          %s451 = sand.u32 %s80, 1
          %s452 = scalar_lea.sflag [#allocation3], %s451
          %s453 = sand.u32 %s80, 1
          %s454 = smul.addr %s453, 32
          %s455 = scalar_lea.vmem [#allocation2], %s454
          %456 = dma.done %s452, 512
        $region48: #{postprocess_hoi_pallas.1} parent=43 // pred_fallthru
          _
        // Predicated region
        $region49: #{postprocess_hoi_pallas.1} parent=43 // pred_check
          %p457 = pneg %p121
        $region50: #{postprocess_hoi_pallas.1} parent=43 // pred_check_branch
          %459 = sbr.rel (%p457) target = $region52
        $region51: #{postprocess_hoi_pallas.1} parent=43 // pred_region
          %s460 = smul.u32 4, %s20
          %p461 = scmp.lt.s32.totalorder %s460, 7
          %s462 = scalar_select %p461, %s460, 7
          %s463 = smul.addr %s462, 8
          %s464 = scalar_lea.vmem %s3, %s463
        $region52: #{postprocess_hoi_pallas.1} parent=43 // pred_fallthru
          _
        // Predicated region
        $region53: #{postprocess_hoi_pallas.1} parent=43 // pred_check
          %p465 = pneg %p147
        $region54: #{postprocess_hoi_pallas.1} parent=43 // pred_check_branch
          %467 = sbr.rel (%p465) target = $region56
        $region55: #{postprocess_hoi_pallas.1} parent=43 // pred_region
          %p468 = scmp.lt.s32.totalorder %s20, 1
          %s469 = scalar_select %p468, %s20, 1
          %s470 = scalar_lea.vmem %s4, %s469
        $region56: #{postprocess_hoi_pallas.1} parent=43 // pred_fallthru
          _
      $region44: #{postprocess_hoi_pallas.1} parent=5 // pred_fallthru
        _
    $region6: #{postprocess_hoi_pallas.1} parent=1 // loop_footer
      %s18 = sadd.s32 1, %s14
    $region7: #{postprocess_hoi_pallas.1} parent=1 // loop_footer_branch
      %13 = sbr.rel target = $region3
    $region8: #{postprocess_hoi_pallas.1} parent=1 // loop_exit
      _
    %471 = vsyncpa [#allocation3], 1
    %s472 = scalar_lea.sflag [#allocation3], 1
    %473 = vsyncpa %s472, 1

</llo_original>
